<compile_context>
chip_gen: v7x
topology: tpu7x:2x2x1
jax: 0.10.0
libtpu: 0.0.40
codegen_flags: <defaults>
</compile_context>

<pallas_src>
import jax
import jax.numpy as jnp
from jax import lax
from jax.experimental import pallas as pl
from jax.experimental.pallas import tpu as pltpu

HIDDEN = 10
LN_EPS = 1e-5
LANE = 128
SUBLANE = 8


def _round_up(n: int, m: int) -> int:
    return ((n + m - 1) // m) * m


def toy_model_kernel(x_ref, w1_ref, w2_ref, bias_ref, o_ref):
    # x_ref:    [TILE_B, in]   (tiled over batch; ragged last block handled by Pallas)
    # w1_ref:   [in, 10]       (VMEM-resident across the grid)
    # w2_ref:   [10, out]      (gamma already folded in; VMEM-resident)
    # bias_ref: [1, out]       (= beta @ w2, f32; VMEM-resident)
    # o_ref:    [TILE_B, out]  (true output width; no padded HBM write bytes)
    x = x_ref[...]

    # fc1 (no bias) + ReLU — MXU matmul with f32 accumulation.
    h = jnp.dot(x, w1_ref[...], preferred_element_type=jnp.float32)   # [TB, 10] f32
    h = jnp.maximum(h, 0.0)

    # LayerNorm statistics over the last (size-10) axis, biased variance, f32.
    # (Exact elementwise math; see header note 7 re: moving reduces onto the MXU.)
    mean = jnp.mean(h, axis=-1, keepdims=True)                         # [TB, 1]
    centered = h - mean
    var = jnp.mean(centered * centered, axis=-1, keepdims=True)
    inv_std = lax.rsqrt(var + LN_EPS)
    h_hat = centered * inv_std                                         # [TB, 10]

    # fc2 with LN affine folded in:  (h_hat * gamma + beta) @ w2
    #   == h_hat @ (gamma[:,None] * w2) + beta @ w2 == h_hat @ w2_eff + bias
    out = jnp.dot(h_hat.astype(w2_ref.dtype), w2_ref[...],
                  preferred_element_type=jnp.float32)                  # [TB, out]
    out = out + bias_ref[...]
    o_ref[...] = out.astype(o_ref.dtype)


def toy_model_forward(x, w1_t, w2_t, gamma, beta, *,
                      tile_b=8192, vmem_limit_bytes=32 * 1024 * 1024):
    """x: [B, in]; w1_t: [in, 10]; w2_t: [10, out]; gamma/beta: [10]."""
    B, in_features = x.shape
    hidden, out_features = w2_t.shape
    assert hidden == HIDDEN

    out_dtype = x.dtype  # emit module dtype (halves output bytes for bf16 inputs)

    # --- wrapper-side prep (tiny, one-time ops) ---
    # Fold LayerNorm affine into fc2.
    w2_eff = gamma.astype(w2_t.dtype)[:, None] * w2_t                   # [10, out]
    bias = (beta.astype(jnp.float32) @ w2_t.astype(jnp.float32)).reshape(1, out_features)

    # --- batch-tile sizing ---
    in_itemsize = jnp.dtype(x.dtype).itemsize
    out_itemsize = jnp.dtype(out_dtype).itemsize
    # Per-row VMEM footprint of the pipelined tiles (lane-padded to 128,
    # double-buffered for both the input and the output tile).
    bytes_per_row = 2 * (_round_up(in_features, LANE) * in_itemsize
                         + _round_up(out_features, LANE) * out_itemsize)
    vmem_budget = int(0.75 * vmem_limit_bytes)          # leave headroom for weights/slop
    tb_vmem = max(SUBLANE, (vmem_budget // bytes_per_row) // SUBLANE * SUBLANE)
    # >= 2 grid steps whenever B allows, so v7x's 2 TensorCores both get work.
    tb_split = max(SUBLANE, _round_up(pl.cdiv(B, 2), SUBLANE))
    tb = max(SUBLANE, min(tile_b, tb_vmem, tb_split))
    grid = (pl.cdiv(B, tb),)   # ragged last block: no jnp.pad of x needed

    cost = pl.CostEstimate(
        flops=2 * B * (in_features * hidden + hidden * out_features),
        transcendentals=B,  # one rsqrt per row
        bytes_accessed=(in_itemsize * B * in_features               # x in
                        + out_itemsize * B * out_features           # out
                        + in_itemsize * in_features * hidden        # w1
                        + jnp.dtype(w2_eff.dtype).itemsize * hidden * out_features
                        + 4 * out_features),                        # bias
    )

    out = pl.pallas_call(
        toy_model_kernel,
        out_shape=jax.ShapeDtypeStruct((B, out_features), out_dtype),
        grid=grid,
        in_specs=[
            pl.BlockSpec((tb, in_features), lambda i: (i, 0)),        # x: tiled over batch
            pl.BlockSpec((in_features, HIDDEN), lambda i: (0, 0)),    # w1: resident
            pl.BlockSpec((HIDDEN, out_features), lambda i: (0, 0)),   # w2_eff: resident
            pl.BlockSpec((1, out_features), lambda i: (0, 0)),        # bias: resident
        ],
        out_specs=pl.BlockSpec((tb, out_features), lambda i: (i, 0)),
        compiler_params=pltpu.CompilerParams(
            dimension_semantics=("parallel",),
            vmem_limit_bytes=vmem_limit_bytes,
        ),
        cost_estimate=cost,
    )(x, w1_t, w2_eff, bias)

    return out


def reference_forward(x, w1_t, w2_t, gamma, beta):
    h = jnp.maximum(x @ w1_t, 0.0)
    mean = jnp.mean(h, axis=-1, keepdims=True)
    var = jnp.mean((h - mean) ** 2, axis=-1, keepdims=True)
    h = (h - mean) / jnp.sqrt(var + LN_EPS) * gamma + beta
    return h @ w2_t


if __name__ == "__main__":
    # Small shapes consistent with the module: batch=8, in_features=32, out_features=16.
    B, IN_F, OUT_F = 8, 32, 16

    key = jax.random.PRNGKey(0)
    kx, k1, k2 = jax.random.split(key, 3)

    x = jax.random.normal(kx, (B, IN_F), dtype=jnp.float32)

    # Deterministic parameter init (Kaiming-uniform-like bounds, as nn.Linear would do).
    bound1 = 1.0 / (IN_F ** 0.5)
    bound2 = 1.0 / (HIDDEN ** 0.5)
    # Stored pre-transposed relative to PyTorch's [out, in] layout.
    w1_t = jax.random.uniform(k1, (IN_F, HIDDEN), minval=-bound1, maxval=bound1,
                              dtype=jnp.float32)
    w2_t = jax.random.uniform(k2, (HIDDEN, OUT_F), minval=-bound2, maxval=bound2,
                              dtype=jnp.float32)
    gamma = jnp.ones((HIDDEN,), dtype=jnp.float32)   # LayerNorm weight init
    beta = jnp.zeros((HIDDEN,), dtype=jnp.float32)   # LayerNorm bias init

    out = toy_model_forward(x, w1_t, w2_t, gamma, beta)
    out = jax.block_until_ready(out)

    ref = reference_forward(x, w1_t, w2_t, gamma, beta)
    assert out.shape == (B, OUT_F)
    assert out.dtype == x.dtype
    assert jnp.allclose(out, ref, atol=1e-5, rtol=1e-5), "mismatch vs reference"

    # Structural smoke test for the new multi-step / ragged-last-block grid path
    # (B not a multiple of the tile, grid of 2 "parallel" steps, masked tail store).
    # Loose tolerance only because XLA's default f32 matmul precision for the
    # reference may differ from Mosaic's; the tight numerics check is above.
    B2 = 1000
    x2 = jax.random.normal(jax.random.PRNGKey(1), (B2, IN_F), dtype=jnp.float32)
    out2 = jax.block_until_ready(toy_model_forward(x2, w1_t, w2_t, gamma, beta))
    ref2 = reference_forward(x2, w1_t, w2_t, gamma, beta)
    assert out2.shape == (B2, OUT_F)
    assert jnp.allclose(out2, ref2, atol=1e-2, rtol=1e-2), "mismatch on ragged-grid path"

    print("KERNEL_OK")
</pallas_src>

<mosaic_0001>
module attributes {stable_mosaic.version = 11 : i64} {
  func.func @toy_model_kernel(%arg0: i32, %arg1: memref<8x32xf32, #tpu.memory_space<vmem>>, %arg2: memref<32x10xf32, #tpu.memory_space<vmem>>, %arg3: memref<10x16xf32, #tpu.memory_space<vmem>>, %arg4: memref<1x16xf32, #tpu.memory_space<vmem>>, %arg5: memref<8x16xf32, #tpu.memory_space<vmem>>) attributes {dimension_semantics = [#tpu.dimension_semantics<parallel>], iteration_bounds = array<i64: 1>, scalar_prefetch = 0 : i64, scratch_operands = 0 : i64, tpu.core_type = #tpu.core_type<tc>, window_params = [{transform_indices = @transform_0, window_bounds = array<i64: 8, 32>}, {pipeline_mode = #tpu.pipeline_mode<synchronous>, transform_indices = @transform_1, window_bounds = array<i64: 32, 10>}, {pipeline_mode = #tpu.pipeline_mode<synchronous>, transform_indices = @transform_2, window_bounds = array<i64: 10, 16>}, {pipeline_mode = #tpu.pipeline_mode<synchronous>, transform_indices = @transform_3, window_bounds = array<i64: 1, 16>}, {transform_indices = @transform_4, window_bounds = array<i64: 8, 16>}]} {
    %c0 = arith.constant 0 : index
    %c0_0 = arith.constant 0 : index
    %0 = vector.load %arg1[%c0, %c0_0] : memref<8x32xf32, #tpu.memory_space<vmem>>, vector<8x32xf32>
    %c0_1 = arith.constant 0 : index
    %c0_2 = arith.constant 0 : index
    %1 = vector.load %arg2[%c0_1, %c0_2] : memref<32x10xf32, #tpu.memory_space<vmem>>, vector<32x10xf32>
    %cst = arith.constant dense<0.000000e+00> : vector<8x10xf32>
    %2 = tpu.matmul %0, %1, %cst {dimension_numbers = #tpu.dot_dimension_numbers<[1], [0], [0], [1], [0, 0, 1, 1], [], []>} : vector<8x32xf32>, vector<32x10xf32>, vector<8x10xf32> -> vector<8x10xf32>
    %cst_3 = arith.constant 0.000000e+00 : f32
    %3 = vector.broadcast %cst_3 : f32 to vector<8x10xf32>
    %4 = arith.maximumf %2, %3 : vector<8x10xf32>
    %cst_4 = arith.constant dense<0.000000e+00> : vector<8xf32>
    %5 = vector.multi_reduction <add>, %4, %cst_4 [1] : vector<8x10xf32> to vector<8xf32>
    %6 = vector.shape_cast %5 : vector<8xf32> to vector<8x1xf32>
    %cst_5 = arith.constant 1.000000e+01 : f32
    %7 = vector.broadcast %cst_5 : f32 to vector<8x1xf32>
    %8 = arith.divf %6, %7 : vector<8x1xf32>
    %9 = vector.broadcast %8 : vector<8x1xf32> to vector<8x10xf32>
    %10 = arith.subf %4, %9 : vector<8x10xf32>
    %11 = arith.mulf %10, %10 : vector<8x10xf32>
    %cst_6 = arith.constant dense<0.000000e+00> : vector<8xf32>
    %12 = vector.multi_reduction <add>, %11, %cst_6 [1] : vector<8x10xf32> to vector<8xf32>
    %13 = vector.shape_cast %12 : vector<8xf32> to vector<8x1xf32>
    %cst_7 = arith.constant 1.000000e+01 : f32
    %14 = vector.broadcast %cst_7 : f32 to vector<8x1xf32>
    %15 = arith.divf %13, %14 : vector<8x1xf32>
    %cst_8 = arith.constant 9.99999974E-6 : f32
    %16 = vector.broadcast %cst_8 : f32 to vector<8x1xf32>
    %17 = arith.addf %15, %16 : vector<8x1xf32>
    %18 = math.rsqrt %17 : vector<8x1xf32>
    %19 = vector.broadcast %18 : vector<8x1xf32> to vector<8x10xf32>
    %20 = arith.mulf %10, %19 : vector<8x10xf32>
    %c0_9 = arith.constant 0 : index
    %c0_10 = arith.constant 0 : index
    %21 = vector.load %arg3[%c0_9, %c0_10] : memref<10x16xf32, #tpu.memory_space<vmem>>, vector<10x16xf32>
    %cst_11 = arith.constant dense<0.000000e+00> : vector<8x16xf32>
    %22 = tpu.matmul %20, %21, %cst_11 {dimension_numbers = #tpu.dot_dimension_numbers<[1], [0], [0], [1], [0, 0, 1, 1], [], []>} : vector<8x10xf32>, vector<10x16xf32>, vector<8x16xf32> -> vector<8x16xf32>
    %c0_12 = arith.constant 0 : index
    %c0_13 = arith.constant 0 : index
    %23 = vector.load %arg4[%c0_12, %c0_13] : memref<1x16xf32, #tpu.memory_space<vmem>>, vector<1x16xf32>
    %24 = vector.broadcast %23 : vector<1x16xf32> to vector<8x16xf32>
    %25 = arith.addf %22, %24 : vector<8x16xf32>
    %c0_14 = arith.constant 0 : index
    %c0_15 = arith.constant 0 : index
    %26 = vector.load %arg5[%c0_14, %c0_15] : memref<8x16xf32, #tpu.memory_space<vmem>>, vector<8x16xf32>
    tpu.vector_store %arg5[%c0_14, %c0_15], %25 {strides = array<i32>} : memref<8x16xf32, #tpu.memory_space<vmem>>, vector<8x16xf32>,
    return
  }
  func.func @transform_0(%arg0: i32) -> (i32, i32) {
    %c0_i32 = arith.constant 0 : i32
    %c0_i32_0 = arith.constant 0 : i32
    return %arg0, %c0_i32 : i32, i32
  }
  func.func @transform_1(%arg0: i32) -> (i32, i32) {
    %c0_i32 = arith.constant 0 : i32
    %c0_i32_0 = arith.constant 0 : i32
    %c0_i32_1 = arith.constant 0 : i32
    return %c0_i32, %c0_i32_0 : i32, i32
  }
  func.func @transform_2(%arg0: i32) -> (i32, i32) {
    %c0_i32 = arith.constant 0 : i32
    %c0_i32_0 = arith.constant 0 : i32
    %c0_i32_1 = arith.constant 0 : i32
    return %c0_i32, %c0_i32_0 : i32, i32
  }
  func.func @transform_3(%arg0: i32) -> (i32, i32) {
    %c0_i32 = arith.constant 0 : i32
    %c0_i32_0 = arith.constant 0 : i32
    %c0_i32_1 = arith.constant 0 : i32
    return %c0_i32, %c0_i32_0 : i32, i32
  }
  func.func @transform_4(%arg0: i32) -> (i32, i32) {
    %c0_i32 = arith.constant 0 : i32
    %c0_i32_0 = arith.constant 0 : i32
    return %arg0, %c0_i32 : i32, i32
  }
}

</mosaic_0001>

<llo_original>
// kernel: tpu_custom_call.1
$region0: #{tpu_custom_call.1}
  #allocation0 [shape = 'u32[]', space=smem, size = 0x4, offset = 0x4, fixed_abs, tag = 'smem constant byte address 0x4 - core index']
  #allocation1 [shape = 'u32[144,128]{1,0:T(1,128)}', space=vmem, size = 0x12000, scoped, tag = 'internal scratch']
  %s0 = inlined_call_operand.vmem [shape: f32[8,32], index: 0, kind: input, shape index: {}]
  %s1 = inlined_call_operand.vmem [shape: f32[32,10], index: 1, kind: input, shape index: {}]
  %s2 = inlined_call_operand.vmem [shape: f32[10,16], index: 2, kind: input, shape index: {}]
  %s3 = inlined_call_operand.vmem [shape: f32[1,16], index: 3, kind: input, shape index: {}]
  %s4 = inlined_call_operand.hbm [shape: f32[8,16], index: 4, kind: output, shape index: {}]
  %s5 = sld [smem:[#allocation0]]
  $region26: #{tpu_custom_call.1} parent=0
    _
  %s7 = ssub.s32 1, %s5
  %s8 = scalar_select 0, %s7, %s5
  $region1: #{tpu_custom_call.1} parent=0
    #allocation2 [shape = 'u8[4096]{0}', space=vmem, size = 0x1000, scoped, tag = 'output window, operand 0, single buffered']
    #allocation3 [shape = 's32[1]{0}', space=sflag, size = 0x4, scoped, tag = 'scoped memory for tpu_custom_call.1']
    %9 = vsyncpa [#allocation3], 0
    // Predicated region
    $region2: #{tpu_custom_call.1} parent=1 // pred_check
      _
    $region3: #{tpu_custom_call.1} parent=1 // pred_check_branch
      %11 = sbr.rel (0) target = $region5
    $region4: #{tpu_custom_call.1} parent=1 // pred_region
      _
    $region5: #{tpu_custom_call.1} parent=1 // pred_fallthru
      _
    // Predicated region
    $region6: #{tpu_custom_call.1} parent=1 // pred_check
      _
    $region7: #{tpu_custom_call.1} parent=1 // pred_check_branch
      %13 = sbr.rel (0) target = $region9
    $region8: #{tpu_custom_call.1} parent=1 // pred_region
      _
    $region9: #{tpu_custom_call.1} parent=1 // pred_fallthru
      _
    // Predicated region
    $region10: #{tpu_custom_call.1} parent=1 // pred_check
      _
    $region11: #{tpu_custom_call.1} parent=1 // pred_check_branch
      %15 = sbr.rel (0) target = $region13
    $region12: #{tpu_custom_call.1} parent=1 // pred_region
      _
    $region13: #{tpu_custom_call.1} parent=1 // pred_fallthru
      _
    // Predicated region
    $region14: #{tpu_custom_call.1} parent=1 // pred_check
      _
    $region15: #{tpu_custom_call.1} parent=1 // pred_check_branch
      %17 = sbr.rel (0) target = $region17
    $region16: #{tpu_custom_call.1} parent=1 // pred_region
      _
    $region17: #{tpu_custom_call.1} parent=1 // pred_fallthru
      _
    %v18 = vld [vmem:[%s0] sm:$0xff]
    %v19 = vld [vmem:[%s1] sm:$0xff]
    %v20 = vld [vmem:[%s1 + $0x8] sm:$0xff]
    %v21 = vld [vmem:[%s1 + $0x10] sm:$0xff]
    %v22 = vld [vmem:[%s1 + $0x18] sm:$0xff]
    %vm23 = vcmask 261120
    %v25 = vsel %vm23, %v18, 0
    %27 = vmatprep.subr.mxu0 0.0
    %28 = vmatpush1.msra.mxu0 %v19
    %29 = vmatprep.subr.mxu0 0.0
    %30 = vmatpush1.msra.mxu0 %v20
    %31 = vmatprep.subr.mxu0 0.0
    %32 = vmatpush1.msra.mxu0 %v21
    %33 = vmatprep.subr.mxu0 0.0
    %34 = vmatpush1.msra.mxu0 %v22
    %35 = vmatprep.subr.mxu0 0.0
    %36 = vmatpush1.msra.mxu0 0.0
    %37 = vmatprep.subr.mxu0 0.0
    %38 = vmatpush1.msra.mxu0 0.0
    %39 = vmatprep.subr.mxu0 0.0
    %40 = vmatpush1.msra.mxu0 0.0
    %41 = vmatprep.subr.mxu0 0.0
    %42 = vmatpush1.msra.mxu0 0.0
    %43 = vmatprep.subr.mxu0 0.0
    %44 = vmatpush1.msra.mxu0 0.0
    %45 = vmatprep.subr.mxu0 0.0
    %46 = vmatpush1.msra.mxu0 0.0
    %47 = vmatprep.subr.mxu0 0.0
    %48 = vmatpush1.msra.mxu0 0.0
    %49 = vmatprep.subr.mxu0 0.0
    %50 = vmatpush1.msra.mxu0 0.0
    %51 = vmatprep.subr.mxu0 0.0
    %52 = vmatpush1.msra.mxu0 0.0
    %53 = vmatprep.subr.mxu0 0.0
    %54 = vmatpush1.msra.mxu0 0.0
    %55 = vmatprep.subr.mxu0 0.0
    %56 = vmatpush1.msra.mxu0 0.0
    %57 = vmatprep.subr.mxu0 0.0
    %58 = vmatpush1.msra.mxu0 0.0
    %59 = vmatprep.subr.mxu0 0.0
    %60 = vmatpush1.msra.mxu0 0.0
    %61 = vmatprep.subr.mxu0 0.0
    %62 = vmatpush1.msra.mxu0 0.0
    %63 = vmatprep.subr.mxu0 0.0
    %64 = vmatpush1.msra.mxu0 0.0
    %65 = vmatprep.subr.mxu0 0.0
    %66 = vmatpush1.msra.mxu0 0.0
    %67 = vmatprep.subr.mxu0 0.0
    %68 = vmatpush1.msra.mxu0 0.0
    %69 = vmatprep.subr.mxu0 0.0
    %70 = vmatpush1.msra.mxu0 0.0
    %71 = vmatprep.subr.mxu0 0.0
    %72 = vmatpush1.msra.mxu0 0.0
    %73 = vmatprep.subr.mxu0 0.0
    %74 = vmatpush1.msra.mxu0 0.0
    %75 = vmatprep.subr.mxu0 0.0
    %76 = vmatpush1.msra.mxu0 0.0
    %77 = vmatprep.subr.mxu0 0.0
    %78 = vmatpush1.msra.mxu0 0.0
    %79 = vmatprep.subr.mxu0 0.0
    %80 = vmatpush1.msra.mxu0 0.0
    %81 = vmatprep.subr.mxu0 0.0
    %82 = vmatpush1.msra.mxu0 0.0
    %83 = vmatprep.subr.mxu0 0.0
    %84 = vmatpush1.msra.mxu0 0.0
    %85 = vmatprep.subr.mxu0 0.0
    %86 = vmatpush1.msra.mxu0 0.0
    %87 = vmatprep.subr.mxu0 0.0
    %88 = vmatpush1.msra.mxu0 0.0
    %89 = vmatprep.subr.mxu0 0.0
    %90 = vmatpush1.msra.mxu0 0.0
    %91 = vmatprep.mubr.f32.mxu0 0.0
    %92 = vmatmul.mubr.f32.gmra.mrb[0].mxu0 %v25
    %v93 = vpop.f32.mrb[0].mxu0
    %v94 = vadd.f32 0.0, %v93
    %v95 = vpop.f32.mrb[0].mxu0
    %96 = vdwg.mxu0
    %v97 = vmax.f32 %v94, 0.0
    %vm98 = vcmask 80896
    %v99 = vsel %vm98, %v97, 0.0
    %100 = vadd.xlane.f32.xlu0 %v99
    %v101 = vpop.xlane.xlu0 %100
    %v102 = vrcp.pop 10.0
    %v103 = vmul.f32 %v101, %v102
    %v104 = vsub.f32 %v97, %v103
    %v105 = vmul.f32 %v104, %v104
    %v106 = vsel %vm98, %v105, 0.0
    %107 = vadd.xlane.f32.xlu0 %v106
    %v108 = vpop.xlane.xlu0 %107
    %v109 = vmul.f32 %v108, %v102
    %v110 = vadd.f32 %v109, 1e-05
    %v111 = vrsqrt.pop %v110
    %v112 = vmul.f32 %v104, %v111
    %v113 = vld [vmem:[%s2] sm:$0xff]
    %v114 = vld [vmem:[%s2 + $0x8] sm:$0x3]
    %v115 = vld [vmem:[%s3] sm:$0x1]
    %v117 = vlaneseq
    %v118 = vshrl.u32 %v117, 7
    %v119 = vsub.s32 0, %v118
    %v120 = vrot.slane %v115, %v119
    %v123 = vsel %vm98, %v112, 0
    %vm125 = vcmask 1041408
    %v127 = vsel %vm125, %v114, 0
    %129 = vmatprep.subr.mxu0 0.0
    %130 = vmatpush1.msra.mxu0 %v113
    %131 = vmatprep.subr.mxu0 0.0
    %132 = vmatpush1.msra.mxu0 %v127
    %133 = vmatprep.subr.mxu0 0.0
    %134 = vmatpush1.msra.mxu0 0.0
    %135 = vmatprep.subr.mxu0 0.0
    %136 = vmatpush1.msra.mxu0 0.0
    %137 = vmatprep.subr.mxu0 0.0
    %138 = vmatpush1.msra.mxu0 0.0
    %139 = vmatprep.subr.mxu0 0.0
    %140 = vmatpush1.msra.mxu0 0.0
    %141 = vmatprep.subr.mxu0 0.0
    %142 = vmatpush1.msra.mxu0 0.0
    %143 = vmatprep.subr.mxu0 0.0
    %144 = vmatpush1.msra.mxu0 0.0
    %145 = vmatprep.subr.mxu0 0.0
    %146 = vmatpush1.msra.mxu0 0.0
    %147 = vmatprep.subr.mxu0 0.0
    %148 = vmatpush1.msra.mxu0 0.0
    %149 = vmatprep.subr.mxu0 0.0
    %150 = vmatpush1.msra.mxu0 0.0
    %151 = vmatprep.subr.mxu0 0.0
    %152 = vmatpush1.msra.mxu0 0.0
    %153 = vmatprep.subr.mxu0 0.0
    %154 = vmatpush1.msra.mxu0 0.0
    %155 = vmatprep.subr.mxu0 0.0
    %156 = vmatpush1.msra.mxu0 0.0
    %157 = vmatprep.subr.mxu0 0.0
    %158 = vmatpush1.msra.mxu0 0.0
    %159 = vmatprep.subr.mxu0 0.0
    %160 = vmatpush1.msra.mxu0 0.0
    %161 = vmatprep.subr.mxu0 0.0
    %162 = vmatpush1.msra.mxu0 0.0
    %163 = vmatprep.subr.mxu0 0.0
    %164 = vmatpush1.msra.mxu0 0.0
    %165 = vmatprep.subr.mxu0 0.0
    %166 = vmatpush1.msra.mxu0 0.0
    %167 = vmatprep.subr.mxu0 0.0
    %168 = vmatpush1.msra.mxu0 0.0
    %169 = vmatprep.subr.mxu0 0.0
    %170 = vmatpush1.msra.mxu0 0.0
    %171 = vmatprep.subr.mxu0 0.0
    %172 = vmatpush1.msra.mxu0 0.0
    %173 = vmatprep.subr.mxu0 0.0
    %174 = vmatpush1.msra.mxu0 0.0
    %175 = vmatprep.subr.mxu0 0.0
    %176 = vmatpush1.msra.mxu0 0.0
    %177 = vmatprep.subr.mxu0 0.0
    %178 = vmatpush1.msra.mxu0 0.0
    %179 = vmatprep.subr.mxu0 0.0
    %180 = vmatpush1.msra.mxu0 0.0
    %181 = vmatprep.subr.mxu0 0.0
    %182 = vmatpush1.msra.mxu0 0.0
    %183 = vmatprep.subr.mxu0 0.0
    %184 = vmatpush1.msra.mxu0 0.0
    %185 = vmatprep.subr.mxu0 0.0
    %186 = vmatpush1.msra.mxu0 0.0
    %187 = vmatprep.subr.mxu0 0.0
    %188 = vmatpush1.msra.mxu0 0.0
    %189 = vmatprep.subr.mxu0 0.0
    %190 = vmatpush1.msra.mxu0 0.0
    %191 = vmatprep.subr.mxu0 0.0
    %192 = vmatpush1.msra.mxu0 0.0
    %193 = vmatprep.mubr.f32.mxu0 0.0
    %194 = vmatmul.mubr.f32.gmra.mrb[0].mxu0 %v123
    %v195 = vpop.f32.mrb[0].mxu0
    %v196 = vadd.f32 %v120, %v195
    %v197 = vpop.f32.mrb[0].mxu0
    %198 = vdwg.mxu0
    %vm199 = vcmask 130048
    %200 = vst.msk [vmem:[#allocation2] sm:$0xff] %vm199, %v196
    // Predicated region
    $region18: #{tpu_custom_call.1} parent=1 // pred_check
      _
    $region19: #{tpu_custom_call.1} parent=1 // pred_check_branch
      %202 = sbr.rel (0) target = $region21
    $region20: #{tpu_custom_call.1} parent=1 // pred_region
      %s204 = ssub.s32 128, 128
      %205 = vsyncadd [#allocation3], %s204
      %s207 = sshll.u32 [#allocation2], 4
      %s208 = int_to_ptr.vmem [resolvable:$true] %s207
      %210 = dma.vmem_to_hbm [thread:$0]  %s208, 128, %s4, [#allocation3]
    $region21: #{tpu_custom_call.1} parent=1 // pred_fallthru
      _
    // Predicated region
    $region22: #{tpu_custom_call.1} parent=1 // pred_check
      _
    $region23: #{tpu_custom_call.1} parent=1 // pred_check_branch
      %212 = sbr.rel (0) target = $region25
    $region24: #{tpu_custom_call.1} parent=1 // pred_region
      %213 = dma.done [#allocation3], 128
    $region25: #{tpu_custom_call.1} parent=1 // pred_fallthru
      _
    %214 = vsyncpa [#allocation3], 1

</llo_original>
